<compile_context>
chip_gen: v6e
topology: v6e:2x2x1
jax: 0.10.0
libtpu: 0.0.40
codegen_flags: <defaults>
</compile_context>

<pallas_src>
import jax
import jax.numpy as jnp
from jax.experimental import pallas as pl
from jax.experimental.pallas import tpu as pltpu


def _erase_add_kernel(x_ref, wcol_ref, wcat_ref, bcat_ref, out_ref):
    """x_ref:[R,F]  wcol_ref:[R,1]  wcat_ref:[F,2F]  bcat_ref:[1,2F]  out:[R,F]."""
    F = x_ref.shape[-1]

    x = x_ref[...].astype(jnp.float32)          # [R, F]
    w = wcol_ref[...].astype(jnp.float32)       # [R, 1] per-concept gate weight

    # One fused matmul for both linear layers (erase | add).
    z = jnp.dot(x, wcat_ref[...], preferred_element_type=jnp.float32) + bcat_ref[...]

    erase_gate = jax.nn.sigmoid(z[:, :F])       # [R, F]
    add_feat = jnp.tanh(z[:, F:])               # [R, F]

    # x - w*erase*x + w*add  ==  x*(1 - w*erase) + w*add
    res = x * (1.0 - w * erase_gate) + w * add_feat
    out_ref[...] = res.astype(out_ref.dtype)


def erase_add_gate_forward(x, weight, w_erase, b_erase, w_add, b_add):
    """Pallas forward.

    x        : [B, C, F]
    weight   : [C]                (per-concept gate weight)
    w_erase  : [F, F]  (stored [in, out]; equivalent to PyTorch x @ W^T)
    b_erase  : [F]
    w_add    : [F, F]
    b_add    : [F]
    returns  : [B, C, F] float32
    """
    B, C, F = x.shape
    R = B * C

    x2d = x.reshape(R, F).astype(jnp.float32)
    # Per-row gate weight column [R, 1] (leading-axis broadcast in the wrapper).
    w_col = jnp.broadcast_to(weight.astype(jnp.float32)[None, :, None],
                             (B, C, 1)).reshape(R, 1)
    # Pack both linear layers into one weight / one bias buffer.
    w_cat = jnp.concatenate([w_erase, w_add], axis=1).astype(jnp.float32)   # [F, 2F]
    b_cat = jnp.concatenate([b_erase, b_add], axis=0).astype(jnp.float32)[None, :]  # [1, 2F]

    vmem = pl.BlockSpec(memory_space=pltpu.MemorySpace.VMEM)

    bytes_accessed = 4 * (x2d.size + w_col.size + w_cat.size + b_cat.size + R * F)
    cost = pl.CostEstimate(flops=2 * R * F * (2 * F) + 8 * R * F,
                           transcendentals=2 * R * F,
                           bytes_accessed=bytes_accessed)

    out2d = pl.pallas_call(
        _erase_add_kernel,
        out_shape=jax.ShapeDtypeStruct((R, F), jnp.float32),
        in_specs=[vmem, vmem, vmem, vmem],
        out_specs=vmem,
        cost_estimate=cost,
    )(x2d, w_col, w_cat, b_cat)

    return out2d.reshape(B, C, F)


def _uniform(key, shape, fan):
    bound = 1.0 / (fan ** 0.5)
    return jax.random.uniform(key, shape, jnp.float32, -bound, bound)


def init_params(key, feature_dim, concept_num):
    ks = jax.random.split(key, 5)
    weight = _uniform(ks[0], (concept_num,), concept_num)          # gate weight
    # nn.Linear(F, F) default init, stored as [in, out]
    w_erase = _uniform(ks[1], (feature_dim, feature_dim), feature_dim)
    b_erase = _uniform(ks[2], (feature_dim,), feature_dim)
    w_add = _uniform(ks[3], (feature_dim, feature_dim), feature_dim)
    b_add = _uniform(ks[4], (feature_dim,), feature_dim)
    return weight, w_erase, b_erase, w_add, b_add


def reference_forward(x, weight, w_erase, b_erase, w_add, b_add):
    """Pure-JAX reference mirroring the PyTorch forward exactly."""
    erase_gate = jax.nn.sigmoid(x @ w_erase + b_erase)
    w = weight[None, :, None]                       # weight.unsqueeze(1) broadcast
    tmp_x = x - w * erase_gate * x
    add_feat = jnp.tanh(x @ w_add + b_add)
    return tmp_x + w * add_feat


if __name__ == "__main__":
    # Small, deterministic shapes; feature_dim chosen lane-dense (=128).
    batch_size = 4
    concept_num = 8
    feature_dim = 128

    key = jax.random.PRNGKey(0)
    k_x, k_par = jax.random.split(key, 2)

    x = jax.random.normal(k_x, (batch_size, concept_num, feature_dim), jnp.float32)
    weight, w_erase, b_erase, w_add, b_add = init_params(k_par, feature_dim, concept_num)

    out = erase_add_gate_forward(x, weight, w_erase, b_erase, w_add, b_add)
    out = jax.block_until_ready(out)

    ref = reference_forward(x, weight, w_erase, b_erase, w_add, b_add)

    assert out.shape == (batch_size, concept_num, feature_dim)
    assert jnp.allclose(out, ref, atol=1e-4, rtol=1e-4)

    print("KERNEL_OK")
</pallas_src>

<mosaic_0001>
module attributes {stable_mosaic.version = 11 : i64} {
  func.func @_erase_add_kernel(%arg0: memref<32x128xf32, #tpu.memory_space<vmem>>, %arg1: memref<32x1xf32, #tpu.memory_space<vmem>>, %arg2: memref<128x256xf32, #tpu.memory_space<vmem>>, %arg3: memref<1x256xf32, #tpu.memory_space<vmem>>, %arg4: memref<32x128xf32, #tpu.memory_space<vmem>>) attributes {dimension_semantics = [], scalar_prefetch = 0 : i64, scratch_operands = 0 : i64, tpu.core_type = #tpu.core_type<tc>} {
    %c0 = arith.constant 0 : index
    %c0_0 = arith.constant 0 : index
    %0 = vector.load %arg0[%c0, %c0_0] : memref<32x128xf32, #tpu.memory_space<vmem>>, vector<32x128xf32>
    %c0_1 = arith.constant 0 : index
    %c0_2 = arith.constant 0 : index
    %1 = vector.load %arg1[%c0_1, %c0_2] : memref<32x1xf32, #tpu.memory_space<vmem>>, vector<32x1xf32>
    %c0_3 = arith.constant 0 : index
    %c0_4 = arith.constant 0 : index
    %2 = vector.load %arg2[%c0_3, %c0_4] : memref<128x256xf32, #tpu.memory_space<vmem>>, vector<128x256xf32>
    %cst = arith.constant dense<0.000000e+00> : vector<32x256xf32>
    %3 = tpu.matmul %0, %2, %cst {dimension_numbers = #tpu.dot_dimension_numbers<[1], [0], [0], [1], [0, 0, 1, 1], [], []>} : vector<32x128xf32>, vector<128x256xf32>, vector<32x256xf32> -> vector<32x256xf32>
    %c0_5 = arith.constant 0 : index
    %c0_6 = arith.constant 0 : index
    %4 = vector.load %arg3[%c0_5, %c0_6] : memref<1x256xf32, #tpu.memory_space<vmem>>, vector<1x256xf32>
    %5 = vector.broadcast %4 : vector<1x256xf32> to vector<32x256xf32>
    %6 = arith.addf %3, %5 : vector<32x256xf32>
    %7 = vector.extract_strided_slice %6 {offsets = [0, 0], sizes = [32, 128], strides = [1, 1]} : vector<32x256xf32> to vector<32x128xf32>
    %8 = arith.negf %7 : vector<32x128xf32>
    %9 = math.exp %8 : vector<32x128xf32>
    %cst_7 = arith.constant 1.000000e+00 : f32
    %10 = vector.broadcast %cst_7 : f32 to vector<32x128xf32>
    %11 = arith.addf %10, %9 : vector<32x128xf32>
    %12 = arith.divf %10, %11 : vector<32x128xf32>
    %13 = vector.extract_strided_slice %6 {offsets = [0, 128], sizes = [32, 128], strides = [1, 1]} : vector<32x256xf32> to vector<32x128xf32>
    %14 = math.tanh %13 : vector<32x128xf32>
    %15 = vector.broadcast %1 : vector<32x1xf32> to vector<32x128xf32>
    %16 = arith.mulf %15, %12 : vector<32x128xf32>
    %cst_8 = arith.constant 1.000000e+00 : f32
    %17 = vector.broadcast %cst_8 : f32 to vector<32x128xf32>
    %18 = arith.subf %17, %16 : vector<32x128xf32>
    %19 = arith.mulf %0, %18 : vector<32x128xf32>
    %20 = vector.broadcast %1 : vector<32x1xf32> to vector<32x128xf32>
    %21 = arith.mulf %20, %14 : vector<32x128xf32>
    %22 = arith.addf %19, %21 : vector<32x128xf32>
    %c0_9 = arith.constant 0 : index
    %c0_10 = arith.constant 0 : index
    %23 = vector.load %arg4[%c0_9, %c0_10] : memref<32x128xf32, #tpu.memory_space<vmem>>, vector<32x128xf32>
    tpu.vector_store %arg4[%c0_9, %c0_10], %22 {strides = array<i32>} : memref<32x128xf32, #tpu.memory_space<vmem>>, vector<32x128xf32>,
    return
  }
}

</mosaic_0001>

<llo_original>
// kernel: tpu_custom_call.1
$region0: #{tpu_custom_call.1}
  #allocation0 [shape = 'u32[]', space=smem, size = 0x4, offset = 0x4, fixed_abs, tag = 'smem constant byte address 0x4 - core index']
  #allocation1 [shape = 'u32[144,128]{1,0:T(1,128)}', space=vmem, size = 0x12000, scoped, tag = 'internal scratch']
  %s0 = inlined_call_operand.vmem [shape: f32[32,128], index: 0, kind: input, shape index: {}]
  %s1 = inlined_call_operand.vmem [shape: f32[32,1], index: 1, kind: input, shape index: {}]
  %s2 = inlined_call_operand.hbm [shape: f32[128,256], index: 2, kind: input, shape index: {}]
  %s3 = inlined_call_operand.vmem [shape: f32[1,256], index: 3, kind: input, shape index: {}]
  %s4 = inlined_call_operand.hbm [shape: f32[32,128], index: 4, kind: output, shape index: {}]
  %s5 = sld [smem:[#allocation0]]
  $region30: #{tpu_custom_call.1} parent=0
    _
  %s7 = ssub.s32 1, %s5
  %s8 = scalar_select 0, %s7, %s5
  $region1: #{tpu_custom_call.1} parent=0
    #allocation2 [shape = 'u8[131072]{0}', space=vmem, size = 0x20000, scoped, tag = 'input window, operand 2, single buffered']
    #allocation3 [shape = 's32[1]{0}', space=sflag, size = 0x4, scoped, tag = 'scoped memory for tpu_custom_call.1']
    #allocation4 [shape = 's32[1]{0}', space=sflag, size = 0x4, scoped, tag = 'scoped memory for tpu_custom_call.1']
    #allocation5 [shape = 'u8[16384]{0}', space=vmem, size = 0x4000, scoped, tag = 'output window, operand 0, single buffered']
    %9 = vsyncpa [#allocation3], 0
    %10 = vsyncpa [#allocation4], 0
    // Predicated region
    $region2: #{tpu_custom_call.1} parent=1 // pred_check
      _
    $region3: #{tpu_custom_call.1} parent=1 // pred_check_branch
      %12 = sbr.rel (0) target = $region5
    $region4: #{tpu_custom_call.1} parent=1 // pred_region
      _
    $region5: #{tpu_custom_call.1} parent=1 // pred_fallthru
      _
    // Predicated region
    $region6: #{tpu_custom_call.1} parent=1 // pred_check
      _
    $region7: #{tpu_custom_call.1} parent=1 // pred_check_branch
      %14 = sbr.rel (0) target = $region9
    $region8: #{tpu_custom_call.1} parent=1 // pred_region
      _
    $region9: #{tpu_custom_call.1} parent=1 // pred_fallthru
      _
    // Predicated region
    $region10: #{tpu_custom_call.1} parent=1 // pred_check
      _
    $region11: #{tpu_custom_call.1} parent=1 // pred_check_branch
      %16 = sbr.rel (0) target = $region13
    $region12: #{tpu_custom_call.1} parent=1 // pred_region
      %s18 = ssub.s32 4096, 4096
      %19 = vsyncadd [#allocation3], %s18
      %s20 = sshll.u32 [#allocation2], 4
      %s21 = int_to_ptr.vmem [resolvable:$true] %s20
      %26 = dma.hbm_to_vmem [thread:$0]  %s2, 4096, %s21, [#allocation3], 256, 256, 16
    $region13: #{tpu_custom_call.1} parent=1 // pred_fallthru
      _
    // Predicated region
    $region14: #{tpu_custom_call.1} parent=1 // pred_check
      _
    $region15: #{tpu_custom_call.1} parent=1 // pred_check_branch
      %28 = sbr.rel (0) target = $region17
    $region16: #{tpu_custom_call.1} parent=1 // pred_region
      _
    $region17: #{tpu_custom_call.1} parent=1 // pred_fallthru
      _
    // Predicated region
    $region18: #{tpu_custom_call.1} parent=1 // pred_check
      _
    $region19: #{tpu_custom_call.1} parent=1 // pred_check_branch
      %30 = sbr.rel (0) target = $region21
    $region20: #{tpu_custom_call.1} parent=1 // pred_region
      %31 = dma.done [#allocation3], 4096
    $region21: #{tpu_custom_call.1} parent=1 // pred_fallthru
      _
    %v32 = vld [vmem:[%s0] sm:$0xff]
    %v33 = vld [vmem:[%s0 + $0x8] sm:$0xff]
    %v34 = vld [vmem:[%s0 + $0x10] sm:$0xff]
    %v35 = vld [vmem:[%s0 + $0x18] sm:$0xff]
    %v36 = vld [vmem:[%s1] sm:$0xff]
    %v37 = vld [vmem:[%s1 + $0x8] sm:$0xff]
    %v38 = vld [vmem:[%s1 + $0x10] sm:$0xff]
    %v39 = vld [vmem:[%s1 + $0x18] sm:$0xff]
    %v40 = vld [vmem:[#allocation2] sm:$0xff]
    %v41 = vld [vmem:[#allocation2 + $0x8] sm:$0xff]
    %v42 = vld [vmem:[#allocation2 + $0x10] sm:$0xff]
    %v43 = vld [vmem:[#allocation2 + $0x18] sm:$0xff]
    %v44 = vld [vmem:[#allocation2 + $0x20] sm:$0xff]
    %v45 = vld [vmem:[#allocation2 + $0x28] sm:$0xff]
    %v46 = vld [vmem:[#allocation2 + $0x30] sm:$0xff]
    %v47 = vld [vmem:[#allocation2 + $0x38] sm:$0xff]
    %v48 = vld [vmem:[#allocation2 + $0x40] sm:$0xff]
    %v49 = vld [vmem:[#allocation2 + $0x48] sm:$0xff]
    %v50 = vld [vmem:[#allocation2 + $0x50] sm:$0xff]
    %v51 = vld [vmem:[#allocation2 + $0x58] sm:$0xff]
    %v52 = vld [vmem:[#allocation2 + $0x60] sm:$0xff]
    %v53 = vld [vmem:[#allocation2 + $0x68] sm:$0xff]
    %v54 = vld [vmem:[#allocation2 + $0x70] sm:$0xff]
    %v55 = vld [vmem:[#allocation2 + $0x78] sm:$0xff]
    %v56 = vld [vmem:[#allocation2 + $0x80] sm:$0xff]
    %v57 = vld [vmem:[#allocation2 + $0x88] sm:$0xff]
    %v58 = vld [vmem:[#allocation2 + $0x90] sm:$0xff]
    %v59 = vld [vmem:[#allocation2 + $0x98] sm:$0xff]
    %v60 = vld [vmem:[#allocation2 + $0xa0] sm:$0xff]
    %v61 = vld [vmem:[#allocation2 + $0xa8] sm:$0xff]
    %v62 = vld [vmem:[#allocation2 + $0xb0] sm:$0xff]
    %v63 = vld [vmem:[#allocation2 + $0xb8] sm:$0xff]
    %v64 = vld [vmem:[#allocation2 + $0xc0] sm:$0xff]
    %v65 = vld [vmem:[#allocation2 + $0xc8] sm:$0xff]
    %v66 = vld [vmem:[#allocation2 + $0xd0] sm:$0xff]
    %v67 = vld [vmem:[#allocation2 + $0xd8] sm:$0xff]
    %v68 = vld [vmem:[#allocation2 + $0xe0] sm:$0xff]
    %v69 = vld [vmem:[#allocation2 + $0xe8] sm:$0xff]
    %v70 = vld [vmem:[#allocation2 + $0xf0] sm:$0xff]
    %v71 = vld [vmem:[#allocation2 + $0xf8] sm:$0xff]
    %v72 = vld [vmem:[%s3] sm:$0x3]
    %v74 = vlaneseq
    %v75 = vshrl.u32 %v74, 7
    %v76 = vsub.s32 0, %v75
    %v77 = vrot.slane %v72, %v76
    %v78 = vlaneseq
    %v79 = vshrl.u32 %v78, 7
    %v80 = vsub.s32 1, %v79
    %v81 = vrot.slane %v72, %v80
    %84 = vmatprep.subr.mxu0 %v71
    %85 = vmatpush1.msra.mxu0 %v70
    %86 = vmatprep.subr.mxu0 %v69
    %87 = vmatpush1.msra.mxu0 %v68
    %88 = vmatprep.subr.mxu0 %v67
    %89 = vmatpush1.msra.mxu0 %v66
    %90 = vmatprep.subr.mxu0 %v65
    %91 = vmatpush1.msra.mxu0 %v64
    %92 = vmatprep.subr.mxu0 %v63
    %93 = vmatpush1.msra.mxu0 %v62
    %94 = vmatprep.subr.mxu0 %v61
    %95 = vmatpush1.msra.mxu0 %v60
    %96 = vmatprep.subr.mxu0 %v59
    %97 = vmatpush1.msra.mxu0 %v58
    %98 = vmatprep.subr.mxu0 %v57
    %99 = vmatpush1.msra.mxu0 %v56
    %100 = vmatprep.subr.mxu0 %v55
    %101 = vmatpush1.msra.mxu0 %v54
    %102 = vmatprep.subr.mxu0 %v53
    %103 = vmatpush1.msra.mxu0 %v52
    %104 = vmatprep.subr.mxu0 %v51
    %105 = vmatpush1.msra.mxu0 %v50
    %106 = vmatprep.subr.mxu0 %v49
    %107 = vmatpush1.msra.mxu0 %v48
    %108 = vmatprep.subr.mxu0 %v47
    %109 = vmatpush1.msra.mxu0 %v46
    %110 = vmatprep.subr.mxu0 %v45
    %111 = vmatpush1.msra.mxu0 %v44
    %112 = vmatprep.subr.mxu0 %v43
    %113 = vmatpush1.msra.mxu0 %v42
    %114 = vmatprep.subr.mxu0 %v41
    %115 = vmatpush1.msra.mxu0 %v40
    %116 = vmatprep.subr.mxu0 0.0
    %117 = vmatpush2.msra.mxu0 0.0
    %118 = vmatprep.subr.mxu0 0.0
    %119 = vmatpush2.msra.mxu0 0.0
    %120 = vmatprep.subr.mxu0 0.0
    %121 = vmatpush2.msra.mxu0 0.0
    %122 = vmatprep.subr.mxu0 0.0
    %123 = vmatpush2.msra.mxu0 0.0
    %124 = vmatprep.subr.mxu0 0.0
    %125 = vmatpush2.msra.mxu0 0.0
    %126 = vmatprep.subr.mxu0 0.0
    %127 = vmatpush2.msra.mxu0 0.0
    %128 = vmatprep.subr.mxu0 0.0
    %129 = vmatpush2.msra.mxu0 0.0
    %130 = vmatprep.subr.mxu0 0.0
    %131 = vmatpush2.msra.mxu0 0.0
    %132 = vmatprep.subr.mxu0 0.0
    %133 = vmatpush2.msra.mxu0 0.0
    %134 = vmatprep.subr.mxu0 0.0
    %135 = vmatpush2.msra.mxu0 0.0
    %136 = vmatprep.subr.mxu0 0.0
    %137 = vmatpush2.msra.mxu0 0.0
    %138 = vmatprep.subr.mxu0 0.0
    %139 = vmatpush2.msra.mxu0 0.0
    %140 = vmatprep.subr.mxu0 0.0
    %141 = vmatpush2.msra.mxu0 0.0
    %142 = vmatprep.subr.mxu0 0.0
    %143 = vmatpush2.msra.mxu0 0.0
    %144 = vmatprep.subr.mxu0 0.0
    %145 = vmatpush2.msra.mxu0 0.0
    %146 = vmatprep.subr.mxu0 0.0
    %147 = vmatpush2.msra.mxu0 0.0
    %148 = vmatprep.mubr.f32.mxu0 0.0
    %149 = vmatmul.mubr.f32.gmra.mxu0 %v32
    %v150 = vpop.f32.mrf.mxu0
    %v151 = vadd.f32 %v77, %v150
    %v152 = vpop.f32.mrf.mxu0
    %v153 = vadd.f32 %v81, %v152
    %154 = vmatprep.mubr.f32.mxu0 0.0
    %155 = vmatmul.mubr.f32.gmra.mxu0 %v33
    %v156 = vpop.f32.mrf.mxu0
    %v157 = vadd.f32 %v77, %v156
    %v158 = vpop.f32.mrf.mxu0
    %v159 = vadd.f32 %v81, %v158
    %160 = vmatprep.mubr.f32.mxu0 0.0
    %161 = vmatmul.mubr.f32.gmra.mxu0 %v34
    %v162 = vpop.f32.mrf.mxu0
    %v163 = vadd.f32 %v77, %v162
    %v164 = vpop.f32.mrf.mxu0
    %v165 = vadd.f32 %v81, %v164
    %166 = vmatprep.mubr.f32.mxu0 0.0
    %167 = vmatmul.mubr.f32.gmra.mxu0 %v35
    %v168 = vpop.f32.mrf.mxu0
    %v169 = vadd.f32 %v77, %v168
    %v170 = vpop.f32.mrf.mxu0
    %v171 = vadd.f32 %v81, %v170
    %172 = vdwg.mxu0
    %v173 = vxor.u32 %v151, 2147483648
    %v174 = vxor.u32 %v157, 2147483648
    %v175 = vxor.u32 %v163, 2147483648
    %v176 = vxor.u32 %v169, 2147483648
    %v177 = vmul.f32 %v173, 1.442695
    %v178 = vpow.pop %v177
    %v179 = vmul.f32 %v174, 1.442695
    %v180 = vpow.pop %v179
    %v181 = vmul.f32 %v175, 1.442695
    %v182 = vpow.pop %v181
    %v183 = vmul.f32 %v176, 1.442695
    %v184 = vpow.pop %v183
    %v185 = vadd.f32 %v178, 1.0
    %v186 = vadd.f32 %v180, 1.0
    %v187 = vadd.f32 %v182, 1.0
    %v188 = vadd.f32 %v184, 1.0
    %v189 = vrcp.pop %v185
    %v190 = vmul.f32 1.0, %v189
    %v191 = vrcp.pop %v186
    %v192 = vmul.f32 1.0, %v191
    %v193 = vrcp.pop %v187
    %v194 = vmul.f32 1.0, %v193
    %v195 = vrcp.pop %v188
    %v196 = vmul.f32 1.0, %v195
    %v197 = vtanh.pop %v153
    %v198 = vtanh.pop %v159
    %v199 = vtanh.pop %v165
    %v200 = vtanh.pop %v171
    %202 = vset.pattern.permute.xlu0 0
    %203 = vperm.xlu0 %202, %v36
    %v204 = vpop.permute.xlu0 %203
    %207 = vset.pattern.permute.xlu0 0
    %208 = vperm.xlu0 %207, %v37
    %v209 = vpop.permute.xlu0 %208
    %212 = vset.pattern.permute.xlu0 0
    %213 = vperm.xlu0 %212, %v38
    %v214 = vpop.permute.xlu0 %213
    %217 = vset.pattern.permute.xlu0 0
    %218 = vperm.xlu0 %217, %v39
    %v219 = vpop.permute.xlu0 %218
    %v221 = vmul.f32 %v204, %v190
    %v222 = vmul.f32 %v209, %v192
    %v223 = vmul.f32 %v214, %v194
    %v224 = vmul.f32 %v219, %v196
    %v225 = vsub.f32 1.0, %v221
    %v226 = vsub.f32 1.0, %v222
    %v227 = vsub.f32 1.0, %v223
    %v228 = vsub.f32 1.0, %v224
    %v229 = vmul.f32 %v32, %v225
    %v230 = vmul.f32 %v33, %v226
    %v231 = vmul.f32 %v34, %v227
    %v232 = vmul.f32 %v35, %v228
    %v233 = vmul.f32 %v204, %v197
    %v234 = vmul.f32 %v209, %v198
    %v235 = vmul.f32 %v214, %v199
    %v236 = vmul.f32 %v219, %v200
    %v237 = vadd.f32 %v229, %v233
    %v238 = vadd.f32 %v230, %v234
    %v239 = vadd.f32 %v231, %v235
    %v240 = vadd.f32 %v232, %v236
    %241 = vst [vmem:[#allocation5] sm:$0xff] %v237
    %242 = vst [vmem:[#allocation5 + $0x8] sm:$0xff] %v238
    %243 = vst [vmem:[#allocation5 + $0x10] sm:$0xff] %v239
    %244 = vst [vmem:[#allocation5 + $0x18] sm:$0xff] %v240
    // Predicated region
    $region22: #{tpu_custom_call.1} parent=1 // pred_check
      _
    $region23: #{tpu_custom_call.1} parent=1 // pred_check_branch
      %246 = sbr.rel (0) target = $region25
    $region24: #{tpu_custom_call.1} parent=1 // pred_region
      %s248 = ssub.s32 512, 512
      %249 = vsyncadd [#allocation4], %s248
      %s250 = sshll.u32 [#allocation5], 4
      %s251 = int_to_ptr.vmem [resolvable:$true] %s250
      %256 = dma.vmem_to_hbm [thread:$0]  %s251, 512, %s4, [#allocation4], 128, 128, 8
    $region25: #{tpu_custom_call.1} parent=1 // pred_fallthru
      _
    // Predicated region
    $region26: #{tpu_custom_call.1} parent=1 // pred_check
      _
    $region27: #{tpu_custom_call.1} parent=1 // pred_check_branch
      %258 = sbr.rel (0) target = $region29
    $region28: #{tpu_custom_call.1} parent=1 // pred_region
      %259 = dma.done [#allocation4], 512
    $region29: #{tpu_custom_call.1} parent=1 // pred_fallthru
      _
    %260 = vsyncpa [#allocation3], 1
    %261 = vsyncpa [#allocation4], 1

</llo_original>
